<compile_context>
chip_gen: v7x
topology: tpu7x:2x2x1
jax: 0.10.0
libtpu: 0.0.40
codegen_flags: <defaults>
</compile_context>

<pallas_src>
from functools import partial

import numpy as np
import jax
import jax.numpy as jnp
from jax.experimental import pallas as pl
from jax.experimental.pallas import tpu as pltpu

F32 = jnp.float32
BF16 = jnp.bfloat16


# --------------------------------------------------------------------------
# Fused kernel:
#   [LayerNorm] -> bf16 matmul (f32 acc) -> (+bias) * lr_mul -> LeakyReLU(0.2)
# --------------------------------------------------------------------------
def _equal_linear_kernel(*refs, lr_mul, pre_norm, has_bias):
    it = iter(refs)
    x_ref = next(it)                           # (tm, K)  f32
    w_ref = next(it)                           # (K, tn)  bf16
    g_ref = next(it) if pre_norm else None     # (1, K)   f32
    b2_ref = next(it) if pre_norm else None    # (1, K)   f32
    bias_ref = next(it) if has_bias else None  # (1, tn)  f32
    o_ref = next(it)                           # (tm, tn) f32

    x = x_ref[...].astype(jnp.float32)
    if pre_norm:
        mu = jnp.mean(x, axis=-1, keepdims=True)
        var = jnp.mean(jnp.square(x - mu), axis=-1, keepdims=True)
        x = (x - mu) * jax.lax.rsqrt(var + 1e-5)          # rsqrt -> EUP slot
        x = x * g_ref[...] + b2_ref[...]

    # MXU matmul: bf16 operands, f32 accumulation.
    y = jnp.dot(x.astype(BF16), w_ref[...], preferred_element_type=jnp.float32)

    # lr_mul post-scale fused with bias add: (y + b) * lr == y*lr + (b*lr).
    if has_bias:
        y = (y + bias_ref[...]) * lr_mul
    else:
        y = y * lr_mul

    # LeakyReLU(0.2) epilogue in f32.
    o_ref[...] = jnp.where(y >= 0.0, y, 0.2 * y).astype(o_ref.dtype)


def _pick_tile(dim, candidates):
    for c in candidates:
        if c <= dim and dim % c == 0:
            return c
    return dim  # full extent (always a legal block dim)


def equal_linear(x, weight, bias=None, *, lr_mul=1.0, pre_norm=False,
                 ln_gamma=None, ln_beta=None):
    """Pallas TPU forward of EqualLinear.

    x:       (..., in_dim) float32
    weight:  (out_dim, in_dim)  (PyTorch nn.Linear layout)
    bias:    (out_dim,) or None
    ln_gamma, ln_beta: (in_dim,) — required when pre_norm=True
    """
    *lead, K = x.shape
    N, K2 = weight.shape
    assert K == K2, (K, K2)
    if pre_norm:
        assert ln_gamma is not None and ln_beta is not None
    M = int(np.prod(lead)) if lead else 1

    x2 = x.reshape(M, K).astype(F32)
    w_t = jnp.asarray(weight, F32).T.astype(BF16)          # (K, N), cast once
    has_bias = bias is not None

    # Tile rows / output features; K stays whole per block.
    tm = _pick_tile(M, (512, 256, 128, 64, 32, 16, 8))
    tn = _pick_tile(N, (512, 256, 128))
    grid = (M // tm, N // tn)

    in_specs = [
        pl.BlockSpec((tm, K), lambda i, j: (i, 0)),
        pl.BlockSpec((K, tn), lambda i, j: (0, j)),
    ]
    args = [x2, w_t]
    if pre_norm:
        in_specs += [pl.BlockSpec((1, K), lambda i, j: (0, 0)),
                     pl.BlockSpec((1, K), lambda i, j: (0, 0))]
        args += [jnp.asarray(ln_gamma, F32).reshape(1, K),
                 jnp.asarray(ln_beta, F32).reshape(1, K)]
    if has_bias:
        in_specs += [pl.BlockSpec((1, tn), lambda i, j: (0, j))]
        args += [jnp.asarray(bias, F32).reshape(1, N)]

    out = pl.pallas_call(
        partial(_equal_linear_kernel, lr_mul=float(lr_mul),
                pre_norm=bool(pre_norm), has_bias=has_bias),
        out_shape=jax.ShapeDtypeStruct((M, N), F32),
        grid=grid,
        in_specs=in_specs,
        out_specs=pl.BlockSpec((tm, tn), lambda i, j: (i, j)),
        compiler_params=pltpu.CompilerParams(
            dimension_semantics=("parallel", "parallel")),
    )(*args)
    return out.reshape(*lead, N)


# --------------------------------------------------------------------------
# Pure-JAX reference (f32) for correctness checking
# --------------------------------------------------------------------------
def equal_linear_ref(x, weight, bias, lr_mul, pre_norm, ln_gamma, ln_beta):
    x = x.astype(F32)
    if pre_norm:
        mu = x.mean(-1, keepdims=True)
        var = ((x - mu) ** 2).mean(-1, keepdims=True)
        x = (x - mu) / jnp.sqrt(var + 1e-5) * ln_gamma + ln_beta
    y = x @ (weight * lr_mul).T
    if bias is not None:
        y = y + bias * lr_mul
    return jnp.where(y >= 0, y, 0.2 * y)


if __name__ == "__main__":
    key = jax.random.PRNGKey(0)
    k1, k2, k3, k4, k5 = jax.random.split(key, 5)

    # Small shapes consistent with the module's use (sequence of latent tokens).
    B, S, in_dim, out_dim = 2, 8, 256, 256
    x = jax.random.normal(k1, (B, S, in_dim), F32)
    weight = jax.random.normal(k2, (out_dim, in_dim), F32)      # torch.randn init
    bias = 0.1 * jax.random.normal(k3, (out_dim,), F32)
    gamma = 1.0 + 0.1 * jax.random.normal(k4, (in_dim,), F32)   # LayerNorm affine
    beta = 0.1 * jax.random.normal(k5, (in_dim,), F32)

    cases = [
        dict(bias=bias, lr_mul=0.01, pre_norm=False, ln_gamma=None, ln_beta=None),
        dict(bias=bias, lr_mul=1.0, pre_norm=True, ln_gamma=gamma, ln_beta=beta),
        dict(bias=None, lr_mul=1.0, pre_norm=False, ln_gamma=None, ln_beta=None),
    ]
    for cfg in cases:
        out = equal_linear(x, weight, **cfg)
        out = jax.block_until_ready(out)
        ref = equal_linear_ref(x, weight, cfg["bias"], cfg["lr_mul"],
                               cfg["pre_norm"], cfg["ln_gamma"], cfg["ln_beta"])
        assert out.shape == (B, S, out_dim), out.shape
        assert bool(jnp.all(jnp.isfinite(out)))
        # bf16-operand / f32-accumulate tolerance vs. full-f32 reference.
        err = float(jnp.max(jnp.abs(out - ref)))
        scale = float(jnp.max(jnp.abs(ref))) + 1e-6
        assert err <= 0.02 * scale + 1e-4, (err, scale, cfg)

    print("KERNEL_OK")
</pallas_src>

<mosaic_0001>
module attributes {stable_mosaic.version = 11 : i64} {
  func.func @_equal_linear_kernel(%arg0: i32, %arg1: i32, %arg2: memref<16x256xf32, #tpu.memory_space<vmem>>, %arg3: memref<256x256xbf16, #tpu.memory_space<vmem>>, %arg4: memref<1x256xf32, #tpu.memory_space<vmem>>, %arg5: memref<16x256xf32, #tpu.memory_space<vmem>>) attributes {dimension_semantics = [#tpu.dimension_semantics<parallel>, #tpu.dimension_semantics<parallel>], iteration_bounds = array<i64: 1, 1>, scalar_prefetch = 0 : i64, scratch_operands = 0 : i64, tpu.core_type = #tpu.core_type<tc>, window_params = [{transform_indices = @transform_0, window_bounds = array<i64: 16, 256>}, {transform_indices = @transform_1, window_bounds = array<i64: 256, 256>}, {transform_indices = @transform_2, window_bounds = array<i64: 1, 256>}, {transform_indices = @transform_3, window_bounds = array<i64: 16, 256>}]} {
    %c0 = arith.constant 0 : index
    %c0_0 = arith.constant 0 : index
    %0 = vector.load %arg2[%c0, %c0_0] : memref<16x256xf32, #tpu.memory_space<vmem>>, vector<16x256xf32>
    %1 = arith.truncf %0 : vector<16x256xf32> to vector<16x256xbf16>
    %c0_1 = arith.constant 0 : index
    %c0_2 = arith.constant 0 : index
    %2 = vector.load %arg3[%c0_1, %c0_2] : memref<256x256xbf16, #tpu.memory_space<vmem>>, vector<256x256xbf16>
    %cst = arith.constant dense<0.000000e+00> : vector<16x256xf32>
    %3 = tpu.matmul %1, %2, %cst {dimension_numbers = #tpu.dot_dimension_numbers<[1], [0], [0], [1], [0, 0, 1, 1], [], []>} : vector<16x256xbf16>, vector<256x256xbf16>, vector<16x256xf32> -> vector<16x256xf32>
    %c0_3 = arith.constant 0 : index
    %c0_4 = arith.constant 0 : index
    %4 = vector.load %arg4[%c0_3, %c0_4] : memref<1x256xf32, #tpu.memory_space<vmem>>, vector<1x256xf32>
    %5 = vector.broadcast %4 : vector<1x256xf32> to vector<16x256xf32>
    %6 = arith.addf %3, %5 : vector<16x256xf32>
    %cst_5 = arith.constant 0.00999999977 : f32
    %7 = vector.broadcast %cst_5 : f32 to vector<16x256xf32>
    %8 = arith.mulf %6, %7 : vector<16x256xf32>
    %cst_6 = arith.constant 0.000000e+00 : f32
    %9 = vector.broadcast %cst_6 : f32 to vector<16x256xf32>
    %10 = arith.cmpf oge, %8, %9 : vector<16x256xf32>
    %cst_7 = arith.constant 2.000000e-01 : f32
    %11 = vector.broadcast %cst_7 : f32 to vector<16x256xf32>
    %12 = arith.mulf %11, %8 : vector<16x256xf32>
    %13 = arith.select %10, %8, %12 : vector<16x256xi1>, vector<16x256xf32>
    %c0_8 = arith.constant 0 : index
    %c0_9 = arith.constant 0 : index
    %14 = vector.load %arg5[%c0_8, %c0_9] : memref<16x256xf32, #tpu.memory_space<vmem>>, vector<16x256xf32>
    tpu.vector_store %arg5[%c0_8, %c0_9], %13 {strides = array<i32>} : memref<16x256xf32, #tpu.memory_space<vmem>>, vector<16x256xf32>,
    return
  }
  func.func @transform_0(%arg0: i32, %arg1: i32) -> (i32, i32) {
    %c0_i32 = arith.constant 0 : i32
    %c0_i32_0 = arith.constant 0 : i32
    return %arg0, %c0_i32 : i32, i32
  }
  func.func @transform_1(%arg0: i32, %arg1: i32) -> (i32, i32) {
    %c0_i32 = arith.constant 0 : i32
    %c0_i32_0 = arith.constant 0 : i32
    return %c0_i32, %arg1 : i32, i32
  }
  func.func @transform_2(%arg0: i32, %arg1: i32) -> (i32, i32) {
    %c0_i32 = arith.constant 0 : i32
    %c0_i32_0 = arith.constant 0 : i32
    return %c0_i32, %arg1 : i32, i32
  }
  func.func @transform_3(%arg0: i32, %arg1: i32) -> (i32, i32) {
    %c0_i32 = arith.constant 0 : i32
    return %arg0, %arg1 : i32, i32
  }
}

</mosaic_0001>

<llo_original>
// kernel: tpu_custom_call.1
$region0: #{tpu_custom_call.1}
  #allocation0 [shape = 'u32[]', space=smem, size = 0x4, offset = 0x4, fixed_abs, tag = 'smem constant byte address 0x4 - core index']
  #allocation1 [shape = 'u32[144,128]{1,0:T(1,128)}', space=vmem, size = 0x12000, scoped, tag = 'internal scratch']
  %s0 = inlined_call_operand.hbm [shape: f32[16,256], index: 0, kind: input, shape index: {}]
  %s1 = inlined_call_operand.hbm [shape: bf16[256,256], index: 1, kind: input, shape index: {}]
  %s2 = inlined_call_operand.vmem [shape: f32[1,256], index: 2, kind: input, shape index: {}]
  %s3 = inlined_call_operand.hbm [shape: f32[16,256], index: 3, kind: output, shape index: {}]
  %s4 = sld [smem:[#allocation0]]
  $region30: #{tpu_custom_call.1} parent=0
    _
  %s6 = ssub.s32 1, %s4
  %s7 = scalar_select 0, %s6, %s4
  $region1: #{tpu_custom_call.1} parent=0
    #allocation2 [shape = 'u8[16384]{0}', space=vmem, size = 0x4000, scoped, tag = 'input window, operand 0, single buffered']
    #allocation3 [shape = 's32[1]{0}', space=sflag, size = 0x4, scoped, tag = 'scoped memory for tpu_custom_call.1']
    #allocation4 [shape = 's32[1]{0}', space=sflag, size = 0x4, scoped, tag = 'scoped memory for tpu_custom_call.1']
    #allocation5 [shape = 'u8[131072]{0}', space=vmem, size = 0x20000, scoped, tag = 'input window, operand 1, single buffered']
    #allocation6 [shape = 's32[1]{0}', space=sflag, size = 0x4, scoped, tag = 'scoped memory for tpu_custom_call.1']
    #allocation7 [shape = 'u8[16384]{0}', space=vmem, size = 0x4000, scoped, tag = 'output window, operand 0, single buffered']
    %8 = vsyncpa [#allocation3], 0
    %9 = vsyncpa [#allocation6], 0
    %10 = vsyncpa [#allocation4], 0
    // Predicated region
    $region2: #{tpu_custom_call.1} parent=1 // pred_check
      _
    $region3: #{tpu_custom_call.1} parent=1 // pred_check_branch
      %12 = sbr.rel (0) target = $region5
    $region4: #{tpu_custom_call.1} parent=1 // pred_region
      %s14 = ssub.s32 512, 512
      %15 = vsyncadd [#allocation3], %s14
      %s16 = sshll.u32 [#allocation2], 4
      %s17 = int_to_ptr.vmem [resolvable:$true] %s16
      %22 = dma.hbm_to_vmem [thread:$0]  %s0, 512, %s17, [#allocation3], 256, 256, 16
    $region5: #{tpu_custom_call.1} parent=1 // pred_fallthru
      _
    // Predicated region
    $region6: #{tpu_custom_call.1} parent=1 // pred_check
      _
    $region7: #{tpu_custom_call.1} parent=1 // pred_check_branch
      %24 = sbr.rel (0) target = $region9
    $region8: #{tpu_custom_call.1} parent=1 // pred_region
      %s26 = ssub.s32 4096, 4096
      %27 = vsyncadd [#allocation6], %s26
      %s28 = sshll.u32 [#allocation5], 4
      %s29 = int_to_ptr.vmem [resolvable:$true] %s28
      %34 = dma.hbm_to_vmem [thread:$0]  %s1, 4096, %s29, [#allocation6], 128, 128, 8
    $region9: #{tpu_custom_call.1} parent=1 // pred_fallthru
      _
    // Predicated region
    $region10: #{tpu_custom_call.1} parent=1 // pred_check
      _
    $region11: #{tpu_custom_call.1} parent=1 // pred_check_branch
      %36 = sbr.rel (0) target = $region13
    $region12: #{tpu_custom_call.1} parent=1 // pred_region
      _
    $region13: #{tpu_custom_call.1} parent=1 // pred_fallthru
      _
    // Predicated region
    $region14: #{tpu_custom_call.1} parent=1 // pred_check
      _
    $region15: #{tpu_custom_call.1} parent=1 // pred_check_branch
      %38 = sbr.rel (0) target = $region17
    $region16: #{tpu_custom_call.1} parent=1 // pred_region
      %39 = dma.done [#allocation3], 512
    $region17: #{tpu_custom_call.1} parent=1 // pred_fallthru
      _
    // Predicated region
    $region18: #{tpu_custom_call.1} parent=1 // pred_check
      _
    $region19: #{tpu_custom_call.1} parent=1 // pred_check_branch
      %41 = sbr.rel (0) target = $region21
    $region20: #{tpu_custom_call.1} parent=1 // pred_region
      %42 = dma.done [#allocation6], 4096
    $region21: #{tpu_custom_call.1} parent=1 // pred_fallthru
      _
    %v43 = vld [vmem:[#allocation2] sm:$0xff]
    %v44 = vld [vmem:[#allocation2 + $0x8] sm:$0xff]
    %v45 = vld [vmem:[#allocation2 + $0x10] sm:$0xff]
    %v46 = vld [vmem:[#allocation2 + $0x18] sm:$0xff]
    %v47 = vpack.c.bf16 %v45, %v43
    %v48 = vpack.c.bf16 %v46, %v44
    %v49 = vld [vmem:[#allocation5] sm:$0xff]
    %v50 = vld [vmem:[#allocation5 + $0x8] sm:$0xff]
    %v51 = vld [vmem:[#allocation5 + $0x10] sm:$0xff]
    %v52 = vld [vmem:[#allocation5 + $0x18] sm:$0xff]
    %v53 = vld [vmem:[#allocation5 + $0x20] sm:$0xff]
    %v54 = vld [vmem:[#allocation5 + $0x28] sm:$0xff]
    %v55 = vld [vmem:[#allocation5 + $0x30] sm:$0xff]
    %v56 = vld [vmem:[#allocation5 + $0x38] sm:$0xff]
    %v57 = vld [vmem:[#allocation5 + $0x40] sm:$0xff]
    %v58 = vld [vmem:[#allocation5 + $0x48] sm:$0xff]
    %v59 = vld [vmem:[#allocation5 + $0x50] sm:$0xff]
    %v60 = vld [vmem:[#allocation5 + $0x58] sm:$0xff]
    %v61 = vld [vmem:[#allocation5 + $0x60] sm:$0xff]
    %v62 = vld [vmem:[#allocation5 + $0x68] sm:$0xff]
    %v63 = vld [vmem:[#allocation5 + $0x70] sm:$0xff]
    %v64 = vld [vmem:[#allocation5 + $0x78] sm:$0xff]
    %v65 = vld [vmem:[#allocation5 + $0x80] sm:$0xff]
    %v66 = vld [vmem:[#allocation5 + $0x88] sm:$0xff]
    %v67 = vld [vmem:[#allocation5 + $0x90] sm:$0xff]
    %v68 = vld [vmem:[#allocation5 + $0x98] sm:$0xff]
    %v69 = vld [vmem:[#allocation5 + $0xa0] sm:$0xff]
    %v70 = vld [vmem:[#allocation5 + $0xa8] sm:$0xff]
    %v71 = vld [vmem:[#allocation5 + $0xb0] sm:$0xff]
    %v72 = vld [vmem:[#allocation5 + $0xb8] sm:$0xff]
    %v73 = vld [vmem:[#allocation5 + $0xc0] sm:$0xff]
    %v74 = vld [vmem:[#allocation5 + $0xc8] sm:$0xff]
    %v75 = vld [vmem:[#allocation5 + $0xd0] sm:$0xff]
    %v76 = vld [vmem:[#allocation5 + $0xd8] sm:$0xff]
    %v77 = vld [vmem:[#allocation5 + $0xe0] sm:$0xff]
    %v78 = vld [vmem:[#allocation5 + $0xe8] sm:$0xff]
    %v79 = vld [vmem:[#allocation5 + $0xf0] sm:$0xff]
    %v80 = vld [vmem:[#allocation5 + $0xf8] sm:$0xff]
    %v81 = vld [vmem:[%s2] sm:$0x3]
    %v83 = vlaneseq
    %v84 = vshrl.u32 %v83, 7
    %v85 = vsub.s32 0, %v84
    %v86 = vrot.slane %v81, %v85
    %v87 = vlaneseq
    %v88 = vshrl.u32 %v87, 7
    %v89 = vsub.s32 1, %v88
    %v90 = vrot.slane %v81, %v89
    %v125 = vunpack.c.l.b16 %v49
    %v126 = vunpack.c.h.b16 %v49
    %v127 = vunpack.c.l.b16 %v50
    %v128 = vunpack.c.h.b16 %v50
    %v129 = vunpack.c.l.b16 %v51
    %v130 = vunpack.c.h.b16 %v51
    %v131 = vunpack.c.l.b16 %v52
    %v132 = vunpack.c.h.b16 %v52
    %v133 = vunpack.c.l.b16 %v53
    %v134 = vunpack.c.h.b16 %v53
    %v135 = vunpack.c.l.b16 %v54
    %v136 = vunpack.c.h.b16 %v54
    %v137 = vunpack.c.l.b16 %v55
    %v138 = vunpack.c.h.b16 %v55
    %v139 = vunpack.c.l.b16 %v56
    %v140 = vunpack.c.h.b16 %v56
    %v141 = vunpack.c.l.b16 %v57
    %v142 = vunpack.c.h.b16 %v57
    %v143 = vunpack.c.l.b16 %v58
    %v144 = vunpack.c.h.b16 %v58
    %v145 = vunpack.c.l.b16 %v59
    %v146 = vunpack.c.h.b16 %v59
    %v147 = vunpack.c.l.b16 %v60
    %v148 = vunpack.c.h.b16 %v60
    %v149 = vunpack.c.l.b16 %v61
    %v150 = vunpack.c.h.b16 %v61
    %v151 = vunpack.c.l.b16 %v62
    %v152 = vunpack.c.h.b16 %v62
    %v153 = vunpack.c.l.b16 %v63
    %v154 = vunpack.c.h.b16 %v63
    %v155 = vunpack.c.l.b16 %v64
    %v156 = vunpack.c.h.b16 %v64
    %v157 = vunpack.c.l.b16 %v65
    %v158 = vunpack.c.h.b16 %v65
    %v159 = vunpack.c.l.b16 %v66
    %v160 = vunpack.c.h.b16 %v66
    %v161 = vunpack.c.l.b16 %v67
    %v162 = vunpack.c.h.b16 %v67
    %v163 = vunpack.c.l.b16 %v68
    %v164 = vunpack.c.h.b16 %v68
    %v165 = vunpack.c.l.b16 %v69
    %v166 = vunpack.c.h.b16 %v69
    %v167 = vunpack.c.l.b16 %v70
    %v168 = vunpack.c.h.b16 %v70
    %v169 = vunpack.c.l.b16 %v71
    %v170 = vunpack.c.h.b16 %v71
    %v171 = vunpack.c.l.b16 %v72
    %v172 = vunpack.c.h.b16 %v72
    %v173 = vunpack.c.l.b16 %v73
    %v174 = vunpack.c.h.b16 %v73
    %v175 = vunpack.c.l.b16 %v74
    %v176 = vunpack.c.h.b16 %v74
    %v177 = vunpack.c.l.b16 %v75
    %v178 = vunpack.c.h.b16 %v75
    %v179 = vunpack.c.l.b16 %v76
    %v180 = vunpack.c.h.b16 %v76
    %v181 = vunpack.c.l.b16 %v77
    %v182 = vunpack.c.h.b16 %v77
    %v183 = vunpack.c.l.b16 %v78
    %v184 = vunpack.c.h.b16 %v78
    %v185 = vunpack.c.l.b16 %v79
    %v186 = vunpack.c.h.b16 %v79
    %v187 = vunpack.c.l.b16 %v80
    %v188 = vunpack.c.h.b16 %v80
    %v189 = vpack.c.b16 %v127, %v125
    %v190 = vpack.c.b16 %v128, %v126
    %v191 = vpack.c.b16 %v131, %v129
    %v192 = vpack.c.b16 %v132, %v130
    %v193 = vpack.c.b16 %v135, %v133
    %v194 = vpack.c.b16 %v136, %v134
    %v195 = vpack.c.b16 %v139, %v137
    %v196 = vpack.c.b16 %v140, %v138
    %v197 = vpack.c.b16 %v143, %v141
    %v198 = vpack.c.b16 %v144, %v142
    %v199 = vpack.c.b16 %v147, %v145
    %v200 = vpack.c.b16 %v148, %v146
    %v201 = vpack.c.b16 %v151, %v149
    %v202 = vpack.c.b16 %v152, %v150
    %v203 = vpack.c.b16 %v155, %v153
    %v204 = vpack.c.b16 %v156, %v154
    %v205 = vpack.c.b16 %v159, %v157
    %v206 = vpack.c.b16 %v160, %v158
    %v207 = vpack.c.b16 %v163, %v161
    %v208 = vpack.c.b16 %v164, %v162
    %v209 = vpack.c.b16 %v167, %v165
    %v210 = vpack.c.b16 %v168, %v166
    %v211 = vpack.c.b16 %v171, %v169
    %v212 = vpack.c.b16 %v172, %v170
    %v213 = vpack.c.b16 %v175, %v173
    %v214 = vpack.c.b16 %v176, %v174
    %v215 = vpack.c.b16 %v179, %v177
    %v216 = vpack.c.b16 %v180, %v178
    %v217 = vpack.c.b16 %v183, %v181
    %v218 = vpack.c.b16 %v184, %v182
    %v219 = vpack.c.b16 %v187, %v185
    %v220 = vpack.c.b16 %v188, %v186
    %253 = vmatprep.subr.bf16.mxu0 %v190
    %254 = vmatpush1.bf16.msra.mxu0 %v189
    %255 = vmatprep.subr.bf16.mxu0 %v192
    %256 = vmatpush1.bf16.msra.mxu0 %v191
    %257 = vmatprep.subr.bf16.mxu0 %v194
    %258 = vmatpush1.bf16.msra.mxu0 %v193
    %259 = vmatprep.subr.bf16.mxu0 %v196
    %260 = vmatpush1.bf16.msra.mxu0 %v195
    %261 = vmatprep.subr.bf16.mxu0 %v198
    %262 = vmatpush1.bf16.msra.mxu0 %v197
    %263 = vmatprep.subr.bf16.mxu0 %v200
    %264 = vmatpush1.bf16.msra.mxu0 %v199
    %265 = vmatprep.subr.bf16.mxu0 %v202
    %266 = vmatpush1.bf16.msra.mxu0 %v201
    %267 = vmatprep.subr.bf16.mxu0 %v204
    %268 = vmatpush1.bf16.msra.mxu0 %v203
    %269 = vmatprep.subr.bf16.mxu0 %v206
    %270 = vmatpush1.bf16.msra.mxu0 %v205
    %271 = vmatprep.subr.bf16.mxu0 %v208
    %272 = vmatpush1.bf16.msra.mxu0 %v207
    %273 = vmatprep.subr.bf16.mxu0 %v210
    %274 = vmatpush1.bf16.msra.mxu0 %v209
    %275 = vmatprep.subr.bf16.mxu0 %v212
    %276 = vmatpush1.bf16.msra.mxu0 %v211
    %277 = vmatprep.subr.bf16.mxu0 %v214
    %278 = vmatpush1.bf16.msra.mxu0 %v213
    %279 = vmatprep.subr.bf16.mxu0 %v216
    %280 = vmatpush1.bf16.msra.mxu0 %v215
    %281 = vmatprep.subr.bf16.mxu0 %v218
    %282 = vmatpush1.bf16.msra.mxu0 %v217
    %283 = vmatprep.subr.bf16.mxu0 %v220
    %284 = vmatpush1.bf16.msra.mxu0 %v219
    %285 = vmatprep.mubr.bf16.mxu0 %v48
    %286 = vmatmul.mubr.bf16.gmra.mrb[0].mxu0 %v47
    %v287 = vpop.f32.mrb[0].mxu0
    %v288 = vadd.f32 %v86, %v287
    %v289 = vpop.f32.mrb[0].mxu0
    %v290 = vadd.f32 %v90, %v289
    %v291 = vpop.f32.mrb[0].mxu0
    %v292 = vadd.f32 %v86, %v291
    %v293 = vpop.f32.mrb[0].mxu0
    %v294 = vadd.f32 %v90, %v293
    %295 = vdwg.mxu0
    %v296 = vmul.f32 %v288, 0.01
    %v297 = vmul.f32 %v290, 0.01
    %v298 = vmul.f32 %v292, 0.01
    %v299 = vmul.f32 %v294, 0.01
    %vm300 = vcmp.ge.f32.partialorder %v296, 0.0
    %vm301 = vcmp.ge.f32.partialorder %v297, 0.0
    %vm302 = vcmp.ge.f32.partialorder %v298, 0.0
    %vm303 = vcmp.ge.f32.partialorder %v299, 0.0
    %v304 = vmul.f32 %v296, 0.2
    %v305 = vmul.f32 %v297, 0.2
    %v306 = vmul.f32 %v298, 0.2
    %v307 = vmul.f32 %v299, 0.2
    %v308 = vsel %vm300, %v296, %v304
    %v309 = vsel %vm301, %v297, %v305
    %v310 = vsel %vm302, %v298, %v306
    %v311 = vsel %vm303, %v299, %v307
    %312 = vst [vmem:[#allocation7] sm:$0xff] %v308
    %313 = vst [vmem:[#allocation7 + $0x8] sm:$0xff] %v309
    %314 = vst [vmem:[#allocation7 + $0x10] sm:$0xff] %v310
    %315 = vst [vmem:[#allocation7 + $0x18] sm:$0xff] %v311
    // Predicated region
    $region22: #{tpu_custom_call.1} parent=1 // pred_check
      _
    $region23: #{tpu_custom_call.1} parent=1 // pred_check_branch
      %317 = sbr.rel (0) target = $region25
    $region24: #{tpu_custom_call.1} parent=1 // pred_region
      %s319 = ssub.s32 512, 512
      %320 = vsyncadd [#allocation4], %s319
      %s321 = sshll.u32 [#allocation7], 4
      %s322 = int_to_ptr.vmem [resolvable:$true] %s321
      %327 = dma.vmem_to_hbm [thread:$0]  %s322, 512, %s3, [#allocation4], 256, 256, 16
    $region25: #{tpu_custom_call.1} parent=1 // pred_fallthru
      _
    // Predicated region
    $region26: #{tpu_custom_call.1} parent=1 // pred_check
      _
    $region27: #{tpu_custom_call.1} parent=1 // pred_check_branch
      %329 = sbr.rel (0) target = $region29
    $region28: #{tpu_custom_call.1} parent=1 // pred_region
      %330 = dma.done [#allocation4], 512
    $region29: #{tpu_custom_call.1} parent=1 // pred_fallthru
      _
    %331 = vsyncpa [#allocation3], 1
    %332 = vsyncpa [#allocation6], 1
    %333 = vsyncpa [#allocation4], 1

</llo_original>
